<compile_context>
chip_gen: v6e
topology: v6e:2x2x1
jax: 0.10.0
libtpu: 0.0.40
codegen_flags: <defaults>
</compile_context>

<pallas_src>
import functools

import jax
import jax.numpy as jnp
from jax.experimental import pallas as pl
from jax.experimental.pallas import tpu as pltpu

LANE = 128     # lane width (last dim alignment)
SUBLANE = 8    # sublane width (second-to-last dim alignment, f32)


def _round_up(x, m):
    return ((x + m - 1) // m) * m


def mlp_kernel(x_ref, w1_ref, b1_ref, w2_ref, b2_ref, o_ref):
    # fc1: [TB, In_p] @ [In_p, H_p] + [1, H_p]   (bias broadcasts over sublanes)
    h = jnp.dot(x_ref[...], w1_ref[...], preferred_element_type=jnp.float32)
    h = jnp.maximum(h + b1_ref[...], 0.0)
    # fc2: [TB, H_p] @ [H_p, P_p] + [1, P_p]
    out = jnp.dot(h, w2_ref[...], preferred_element_type=jnp.float32)
    out = out + b2_ref[...]
    o_ref[...] = out.astype(o_ref.dtype)


def prepare_params(w1, b1, w2, b2):
    """One-time parameter prep: transpose to (in, out) layout and zero-pad
    feature dims to 128 so the kernel sees lane-dense, MXU-friendly operands.

    Args (PyTorch nn.Linear layout):
      w1: [hidden, input_size], b1: [hidden]
      w2: [num_params, hidden], b2: [num_params]
    Returns:
      (w1t_p, b1_p, w2t_p, b2_p) padded arrays ready for the kernel.
    """
    hidden, in_size = w1.shape
    num_params = w2.shape[0]
    in_p = _round_up(in_size, LANE)
    h_p = _round_up(hidden, LANE)
    p_p = _round_up(num_params, LANE)

    w1t_p = jnp.zeros((in_p, h_p), jnp.float32).at[:in_size, :hidden].set(w1.T)
    b1_p = jnp.zeros((1, h_p), jnp.float32).at[:, :hidden].set(b1)
    w2t_p = jnp.zeros((h_p, p_p), jnp.float32).at[:hidden, :num_params].set(w2.T)
    b2_p = jnp.zeros((1, p_p), jnp.float32).at[:, :num_params].set(b2)
    return w1t_p, b1_p, w2t_p, b2_p


@functools.partial(jax.jit, static_argnames=("num_params", "max_batch_tile"))
def neural_net_forward(x, w1t_p, b1_p, w2t_p, b2_p, *, num_params,
                       max_batch_tile=256):
    """fc1 -> ReLU -> fc2 in one fused, batch-tiled Pallas kernel.

    x: [batch, input_size] float32 (unpadded); params are pre-padded
    (see prepare_params). Returns [batch, num_params] float32.
    """
    batch, in_size = x.shape
    in_p, h_p = w1t_p.shape
    p_p = w2t_p.shape[1]

    # Batch tile: cap at max_batch_tile; small batches round up to sublane (8).
    tb = max_batch_tile if batch >= max_batch_tile else _round_up(batch, SUBLANE)
    b_p = _round_up(batch, tb)

    # Pad x only if needed (no-op when shapes are already aligned).
    if (b_p, in_p) != (batch, in_size):
        x_p = jnp.zeros((b_p, in_p), x.dtype).at[:batch, :in_size].set(x)
    else:
        x_p = x

    grid = (b_p // tb,)
    out_p = pl.pallas_call(
        mlp_kernel,
        out_shape=jax.ShapeDtypeStruct((b_p, p_p), jnp.float32),
        grid=grid,
        in_specs=[
            # Batch tile of x: streamed / double-buffered across the grid.
            pl.BlockSpec((tb, in_p), lambda i: (i, 0)),
            # Weights & biases: same block every step -> stay resident in VMEM.
            pl.BlockSpec((in_p, h_p), lambda i: (0, 0)),
            pl.BlockSpec((1, h_p), lambda i: (0, 0)),
            pl.BlockSpec((h_p, p_p), lambda i: (0, 0)),
            pl.BlockSpec((1, p_p), lambda i: (0, 0)),
        ],
        out_specs=pl.BlockSpec((tb, p_p), lambda i: (i, 0)),
        compiler_params=pltpu.CompilerParams(
            dimension_semantics=("parallel",),  # shard batch tiles across TCs (v7x)
        ),
    )(x_p, w1t_p, b1_p, w2t_p, b2_p)

    # Slice away batch / output padding.
    return out_p[:batch, :num_params]


if __name__ == "__main__":
    # Small shapes consistent with the module's forward.
    batch = 8
    input_size = 32
    hidden_layer_size = 64
    num_params = 16

    key = jax.random.PRNGKey(0)
    kx, kw1, kb1, kw2, kb2 = jax.random.split(key, 5)

    # PyTorch nn.Linear weight layout: (out_features, in_features).
    x = jax.random.normal(kx, (batch, input_size), dtype=jnp.float32)
    w1 = jax.random.normal(kw1, (hidden_layer_size, input_size), dtype=jnp.float32) * 0.1
    b1 = jax.random.normal(kb1, (hidden_layer_size,), dtype=jnp.float32) * 0.1
    w2 = jax.random.normal(kw2, (num_params, hidden_layer_size), dtype=jnp.float32) * 0.1
    b2 = jax.random.normal(kb2, (num_params,), dtype=jnp.float32) * 0.1

    # One-time parameter prep (transpose + pad), hoisted out of the call path.
    w1t_p, b1_p, w2t_p, b2_p = prepare_params(w1, b1, w2, b2)

    out = neural_net_forward(x, w1t_p, b1_p, w2t_p, b2_p, num_params=num_params)
    out = jax.block_until_ready(out)

    # Reference check in plain JAX (same math as the PyTorch forward).
    ref = jnp.maximum(x @ w1.T + b1, 0.0) @ w2.T + b2
    assert out.shape == (batch, num_params)
    assert jnp.allclose(out, ref, atol=1e-5, rtol=1e-5)

    print("KERNEL_OK")
</pallas_src>

<mosaic_0001>
module attributes {stable_mosaic.version = 11 : i64} {
  func.func @mlp_kernel(%arg0: i32, %arg1: memref<8x128xf32, #tpu.memory_space<vmem>>, %arg2: memref<128x128xf32, #tpu.memory_space<vmem>>, %arg3: memref<1x128xf32, #tpu.memory_space<vmem>>, %arg4: memref<128x128xf32, #tpu.memory_space<vmem>>, %arg5: memref<1x128xf32, #tpu.memory_space<vmem>>, %arg6: memref<8x128xf32, #tpu.memory_space<vmem>>) attributes {dimension_semantics = [#tpu.dimension_semantics<parallel>], iteration_bounds = array<i64: 1>, scalar_prefetch = 0 : i64, scratch_operands = 0 : i64, tpu.core_type = #tpu.core_type<tc>, window_params = [{transform_indices = @transform_0, window_bounds = array<i64: 8, 128>}, {pipeline_mode = #tpu.pipeline_mode<synchronous>, transform_indices = @transform_1, window_bounds = array<i64: 128, 128>}, {pipeline_mode = #tpu.pipeline_mode<synchronous>, transform_indices = @transform_2, window_bounds = array<i64: 1, 128>}, {pipeline_mode = #tpu.pipeline_mode<synchronous>, transform_indices = @transform_3, window_bounds = array<i64: 128, 128>}, {pipeline_mode = #tpu.pipeline_mode<synchronous>, transform_indices = @transform_4, window_bounds = array<i64: 1, 128>}, {transform_indices = @transform_5, window_bounds = array<i64: 8, 128>}]} {
    %c0 = arith.constant 0 : index
    %c0_0 = arith.constant 0 : index
    %0 = vector.load %arg1[%c0, %c0_0] : memref<8x128xf32, #tpu.memory_space<vmem>>, vector<8x128xf32>
    %c0_1 = arith.constant 0 : index
    %c0_2 = arith.constant 0 : index
    %1 = vector.load %arg2[%c0_1, %c0_2] : memref<128x128xf32, #tpu.memory_space<vmem>>, vector<128x128xf32>
    %cst = arith.constant dense<0.000000e+00> : vector<8x128xf32>
    %2 = tpu.matmul %0, %1, %cst {dimension_numbers = #tpu.dot_dimension_numbers<[1], [0], [0], [1], [0, 0, 1, 1], [], []>} : vector<8x128xf32>, vector<128x128xf32>, vector<8x128xf32> -> vector<8x128xf32>
    %c0_3 = arith.constant 0 : index
    %c0_4 = arith.constant 0 : index
    %3 = vector.load %arg3[%c0_3, %c0_4] : memref<1x128xf32, #tpu.memory_space<vmem>>, vector<1x128xf32>
    %4 = vector.broadcast %3 : vector<1x128xf32> to vector<8x128xf32>
    %5 = arith.addf %2, %4 : vector<8x128xf32>
    %cst_5 = arith.constant 0.000000e+00 : f32
    %6 = vector.broadcast %cst_5 : f32 to vector<8x128xf32>
    %7 = arith.maximumf %5, %6 : vector<8x128xf32>
    %c0_6 = arith.constant 0 : index
    %c0_7 = arith.constant 0 : index
    %8 = vector.load %arg4[%c0_6, %c0_7] : memref<128x128xf32, #tpu.memory_space<vmem>>, vector<128x128xf32>
    %cst_8 = arith.constant dense<0.000000e+00> : vector<8x128xf32>
    %9 = tpu.matmul %7, %8, %cst_8 {dimension_numbers = #tpu.dot_dimension_numbers<[1], [0], [0], [1], [0, 0, 1, 1], [], []>} : vector<8x128xf32>, vector<128x128xf32>, vector<8x128xf32> -> vector<8x128xf32>
    %c0_9 = arith.constant 0 : index
    %c0_10 = arith.constant 0 : index
    %10 = vector.load %arg5[%c0_9, %c0_10] : memref<1x128xf32, #tpu.memory_space<vmem>>, vector<1x128xf32>
    %11 = vector.broadcast %10 : vector<1x128xf32> to vector<8x128xf32>
    %12 = arith.addf %9, %11 : vector<8x128xf32>
    %c0_11 = arith.constant 0 : index
    %c0_12 = arith.constant 0 : index
    %13 = vector.load %arg6[%c0_11, %c0_12] : memref<8x128xf32, #tpu.memory_space<vmem>>, vector<8x128xf32>
    tpu.vector_store %arg6[%c0_11, %c0_12], %12 {strides = array<i32>} : memref<8x128xf32, #tpu.memory_space<vmem>>, vector<8x128xf32>,
    return
  }
  func.func @transform_0(%arg0: i32) -> (i32, i32) {
    %c0_i32 = arith.constant 0 : i32
    %c0_i32_0 = arith.constant 0 : i32
    return %arg0, %c0_i32 : i32, i32
  }
  func.func @transform_1(%arg0: i32) -> (i32, i32) {
    %c0_i32 = arith.constant 0 : i32
    %c0_i32_0 = arith.constant 0 : i32
    %c0_i32_1 = arith.constant 0 : i32
    return %c0_i32, %c0_i32_0 : i32, i32
  }
  func.func @transform_2(%arg0: i32) -> (i32, i32) {
    %c0_i32 = arith.constant 0 : i32
    %c0_i32_0 = arith.constant 0 : i32
    %c0_i32_1 = arith.constant 0 : i32
    return %c0_i32, %c0_i32_0 : i32, i32
  }
  func.func @transform_3(%arg0: i32) -> (i32, i32) {
    %c0_i32 = arith.constant 0 : i32
    %c0_i32_0 = arith.constant 0 : i32
    %c0_i32_1 = arith.constant 0 : i32
    return %c0_i32, %c0_i32_0 : i32, i32
  }
  func.func @transform_4(%arg0: i32) -> (i32, i32) {
    %c0_i32 = arith.constant 0 : i32
    %c0_i32_0 = arith.constant 0 : i32
    %c0_i32_1 = arith.constant 0 : i32
    return %c0_i32, %c0_i32_0 : i32, i32
  }
  func.func @transform_5(%arg0: i32) -> (i32, i32) {
    %c0_i32 = arith.constant 0 : i32
    %c0_i32_0 = arith.constant 0 : i32
    return %arg0, %c0_i32 : i32, i32
  }
}

</mosaic_0001>

<llo_original>
// kernel: neural_net_forward.1
$region0: #{neural_net_forward.1}
  #allocation0 [shape = 'u32[]', space=smem, size = 0x4, offset = 0x4, fixed_abs, tag = 'smem constant byte address 0x4 - core index']
  #allocation1 [shape = 'u32[144,128]{1,0:T(1,128)}', space=vmem, size = 0x12000, scoped, tag = 'internal scratch']
  %s0 = inlined_call_operand.vmem [shape: f32[8,128], index: 0, kind: input, shape index: {}]
  %s1 = inlined_call_operand.hbm [shape: f32[128,128], index: 1, kind: input, shape index: {}]
  %s2 = inlined_call_operand.vmem [shape: f32[1,128], index: 2, kind: input, shape index: {}]
  %s3 = inlined_call_operand.hbm [shape: f32[128,128], index: 3, kind: input, shape index: {}]
  %s4 = inlined_call_operand.vmem [shape: f32[1,128], index: 4, kind: input, shape index: {}]
  %s5 = inlined_call_operand.hbm [shape: f32[8,128], index: 5, kind: output, shape index: {}]
  %s6 = sld [smem:[#allocation0]]
  $region38: #{neural_net_forward.1} parent=0
    _
  %s8 = ssub.s32 1, %s6
  %s9 = scalar_select 0, %s8, %s6
  $region1: #{neural_net_forward.1} parent=0
    #allocation2 [shape = 'u8[65536]{0}', space=vmem, size = 0x10000, scoped, tag = 'input window, operand 1, single buffered']
    #allocation3 [shape = 's32[1]{0}', space=sflag, size = 0x4, scoped, tag = 'scoped memory for neural_net_forward.1']
    #allocation4 [shape = 's32[1]{0}', space=sflag, size = 0x4, scoped, tag = 'scoped memory for neural_net_forward.1']
    #allocation5 [shape = 'u8[65536]{0}', space=vmem, size = 0x10000, scoped, tag = 'input window, operand 3, single buffered']
    #allocation6 [shape = 's32[1]{0}', space=sflag, size = 0x4, scoped, tag = 'scoped memory for neural_net_forward.1']
    #allocation7 [shape = 'u8[4096]{0}', space=vmem, size = 0x1000, scoped, tag = 'output window, operand 0, single buffered']
    %10 = vsyncpa [#allocation3], 0
    %11 = vsyncpa [#allocation6], 0
    %12 = vsyncpa [#allocation4], 0
    // Predicated region
    $region2: #{neural_net_forward.1} parent=1 // pred_check
      _
    $region3: #{neural_net_forward.1} parent=1 // pred_check_branch
      %14 = sbr.rel (0) target = $region5
    $region4: #{neural_net_forward.1} parent=1 // pred_region
      _
    $region5: #{neural_net_forward.1} parent=1 // pred_fallthru
      _
    // Predicated region
    $region6: #{neural_net_forward.1} parent=1 // pred_check
      _
    $region7: #{neural_net_forward.1} parent=1 // pred_check_branch
      %16 = sbr.rel (0) target = $region9
    $region8: #{neural_net_forward.1} parent=1 // pred_region
      %s18 = ssub.s32 2048, 2048
      %19 = vsyncadd [#allocation3], %s18
      %s20 = sshll.u32 [#allocation2], 4
      %s21 = int_to_ptr.vmem [resolvable:$true] %s20
      %26 = dma.hbm_to_vmem [thread:$0]  %s1, 2048, %s21, [#allocation3], 128, 128, 8
    $region9: #{neural_net_forward.1} parent=1 // pred_fallthru
      _
    // Predicated region
    $region10: #{neural_net_forward.1} parent=1 // pred_check
      _
    $region11: #{neural_net_forward.1} parent=1 // pred_check_branch
      %28 = sbr.rel (0) target = $region13
    $region12: #{neural_net_forward.1} parent=1 // pred_region
      _
    $region13: #{neural_net_forward.1} parent=1 // pred_fallthru
      _
    // Predicated region
    $region14: #{neural_net_forward.1} parent=1 // pred_check
      _
    $region15: #{neural_net_forward.1} parent=1 // pred_check_branch
      %30 = sbr.rel (0) target = $region17
    $region16: #{neural_net_forward.1} parent=1 // pred_region
      %s32 = ssub.s32 2048, 2048
      %33 = vsyncadd [#allocation6], %s32
      %s34 = sshll.u32 [#allocation5], 4
      %s35 = int_to_ptr.vmem [resolvable:$true] %s34
      %40 = dma.hbm_to_vmem [thread:$0]  %s3, 2048, %s35, [#allocation6], 128, 128, 8
    $region17: #{neural_net_forward.1} parent=1 // pred_fallthru
      _
    // Predicated region
    $region18: #{neural_net_forward.1} parent=1 // pred_check
      _
    $region19: #{neural_net_forward.1} parent=1 // pred_check_branch
      %42 = sbr.rel (0) target = $region21
    $region20: #{neural_net_forward.1} parent=1 // pred_region
      _
    $region21: #{neural_net_forward.1} parent=1 // pred_fallthru
      _
    // Predicated region
    $region22: #{neural_net_forward.1} parent=1 // pred_check
      _
    $region23: #{neural_net_forward.1} parent=1 // pred_check_branch
      %44 = sbr.rel (0) target = $region25
    $region24: #{neural_net_forward.1} parent=1 // pred_region
      %45 = dma.done [#allocation3], 2048
    $region25: #{neural_net_forward.1} parent=1 // pred_fallthru
      _
    // Predicated region
    $region26: #{neural_net_forward.1} parent=1 // pred_check
      _
    $region27: #{neural_net_forward.1} parent=1 // pred_check_branch
      %47 = sbr.rel (0) target = $region29
    $region28: #{neural_net_forward.1} parent=1 // pred_region
      %48 = dma.done [#allocation6], 2048
    $region29: #{neural_net_forward.1} parent=1 // pred_fallthru
      _
    %v49 = vld [vmem:[%s0] sm:$0xff]
    %v50 = vld [vmem:[#allocation2] sm:$0xff]
    %v51 = vld [vmem:[#allocation2 + $0x8] sm:$0xff]
    %v52 = vld [vmem:[#allocation2 + $0x10] sm:$0xff]
    %v53 = vld [vmem:[#allocation2 + $0x18] sm:$0xff]
    %v54 = vld [vmem:[#allocation2 + $0x20] sm:$0xff]
    %v55 = vld [vmem:[#allocation2 + $0x28] sm:$0xff]
    %v56 = vld [vmem:[#allocation2 + $0x30] sm:$0xff]
    %v57 = vld [vmem:[#allocation2 + $0x38] sm:$0xff]
    %v58 = vld [vmem:[#allocation2 + $0x40] sm:$0xff]
    %v59 = vld [vmem:[#allocation2 + $0x48] sm:$0xff]
    %v60 = vld [vmem:[#allocation2 + $0x50] sm:$0xff]
    %v61 = vld [vmem:[#allocation2 + $0x58] sm:$0xff]
    %v62 = vld [vmem:[#allocation2 + $0x60] sm:$0xff]
    %v63 = vld [vmem:[#allocation2 + $0x68] sm:$0xff]
    %v64 = vld [vmem:[#allocation2 + $0x70] sm:$0xff]
    %v65 = vld [vmem:[#allocation2 + $0x78] sm:$0xff]
    %v66 = vld [vmem:[%s2] sm:$0x1]
    %v68 = vlaneseq
    %v69 = vshrl.u32 %v68, 7
    %v70 = vsub.s32 0, %v69
    %v71 = vrot.slane %v66, %v70
    %73 = vmatprep.subr.mxu0 0.0
    %74 = vmatpush1.msra.mxu0 %v65
    %75 = vmatprep.subr.mxu0 0.0
    %76 = vmatpush1.msra.mxu0 %v64
    %77 = vmatprep.subr.mxu0 0.0
    %78 = vmatpush1.msra.mxu0 %v63
    %79 = vmatprep.subr.mxu0 0.0
    %80 = vmatpush1.msra.mxu0 %v62
    %81 = vmatprep.subr.mxu0 0.0
    %82 = vmatpush1.msra.mxu0 %v61
    %83 = vmatprep.subr.mxu0 0.0
    %84 = vmatpush1.msra.mxu0 %v60
    %85 = vmatprep.subr.mxu0 0.0
    %86 = vmatpush1.msra.mxu0 %v59
    %87 = vmatprep.subr.mxu0 0.0
    %88 = vmatpush1.msra.mxu0 %v58
    %89 = vmatprep.subr.mxu0 0.0
    %90 = vmatpush1.msra.mxu0 %v57
    %91 = vmatprep.subr.mxu0 0.0
    %92 = vmatpush1.msra.mxu0 %v56
    %93 = vmatprep.subr.mxu0 0.0
    %94 = vmatpush1.msra.mxu0 %v55
    %95 = vmatprep.subr.mxu0 0.0
    %96 = vmatpush1.msra.mxu0 %v54
    %97 = vmatprep.subr.mxu0 0.0
    %98 = vmatpush1.msra.mxu0 %v53
    %99 = vmatprep.subr.mxu0 0.0
    %100 = vmatpush1.msra.mxu0 %v52
    %101 = vmatprep.subr.mxu0 0.0
    %102 = vmatpush1.msra.mxu0 %v51
    %103 = vmatprep.subr.mxu0 0.0
    %104 = vmatpush1.msra.mxu0 %v50
    %105 = vmatprep.subr.mxu0 0.0
    %106 = vmatpush2.msra.mxu0 0.0
    %107 = vmatprep.subr.mxu0 0.0
    %108 = vmatpush2.msra.mxu0 0.0
    %109 = vmatprep.subr.mxu0 0.0
    %110 = vmatpush2.msra.mxu0 0.0
    %111 = vmatprep.subr.mxu0 0.0
    %112 = vmatpush2.msra.mxu0 0.0
    %113 = vmatprep.subr.mxu0 0.0
    %114 = vmatpush2.msra.mxu0 0.0
    %115 = vmatprep.subr.mxu0 0.0
    %116 = vmatpush2.msra.mxu0 0.0
    %117 = vmatprep.subr.mxu0 0.0
    %118 = vmatpush2.msra.mxu0 0.0
    %119 = vmatprep.subr.mxu0 0.0
    %120 = vmatpush2.msra.mxu0 0.0
    %121 = vmatprep.subr.mxu0 0.0
    %122 = vmatpush2.msra.mxu0 0.0
    %123 = vmatprep.subr.mxu0 0.0
    %124 = vmatpush2.msra.mxu0 0.0
    %125 = vmatprep.subr.mxu0 0.0
    %126 = vmatpush2.msra.mxu0 0.0
    %127 = vmatprep.subr.mxu0 0.0
    %128 = vmatpush2.msra.mxu0 0.0
    %129 = vmatprep.subr.mxu0 0.0
    %130 = vmatpush2.msra.mxu0 0.0
    %131 = vmatprep.subr.mxu0 0.0
    %132 = vmatpush2.msra.mxu0 0.0
    %133 = vmatprep.subr.mxu0 0.0
    %134 = vmatpush2.msra.mxu0 0.0
    %135 = vmatprep.subr.mxu0 0.0
    %136 = vmatpush2.msra.mxu0 0.0
    %137 = vmatprep.mubr.f32.mxu0 0.0
    %138 = vmatmul.mubr.f32.gmra.mxu0 %v49
    %v139 = vpop.f32.mrf.mxu0
    %v140 = vadd.f32 %v71, %v139
    %v141 = vpop.f32.mrf.mxu0
    %142 = vdwg.mxu0
    %v143 = vmax.f32 %v140, 0.0
    %v144 = vld [vmem:[#allocation5] sm:$0xff]
    %v145 = vld [vmem:[#allocation5 + $0x8] sm:$0xff]
    %v146 = vld [vmem:[#allocation5 + $0x10] sm:$0xff]
    %v147 = vld [vmem:[#allocation5 + $0x18] sm:$0xff]
    %v148 = vld [vmem:[#allocation5 + $0x20] sm:$0xff]
    %v149 = vld [vmem:[#allocation5 + $0x28] sm:$0xff]
    %v150 = vld [vmem:[#allocation5 + $0x30] sm:$0xff]
    %v151 = vld [vmem:[#allocation5 + $0x38] sm:$0xff]
    %v152 = vld [vmem:[#allocation5 + $0x40] sm:$0xff]
    %v153 = vld [vmem:[#allocation5 + $0x48] sm:$0xff]
    %v154 = vld [vmem:[#allocation5 + $0x50] sm:$0xff]
    %v155 = vld [vmem:[#allocation5 + $0x58] sm:$0xff]
    %v156 = vld [vmem:[#allocation5 + $0x60] sm:$0xff]
    %v157 = vld [vmem:[#allocation5 + $0x68] sm:$0xff]
    %v158 = vld [vmem:[#allocation5 + $0x70] sm:$0xff]
    %v159 = vld [vmem:[#allocation5 + $0x78] sm:$0xff]
    %v160 = vld [vmem:[%s4] sm:$0x1]
    %v162 = vlaneseq
    %v163 = vshrl.u32 %v162, 7
    %v164 = vsub.s32 0, %v163
    %v165 = vrot.slane %v160, %v164
    %167 = vmatprep.subr.mxu0 0.0
    %168 = vmatpush1.msra.mxu0 %v159
    %169 = vmatprep.subr.mxu0 0.0
    %170 = vmatpush1.msra.mxu0 %v158
    %171 = vmatprep.subr.mxu0 0.0
    %172 = vmatpush1.msra.mxu0 %v157
    %173 = vmatprep.subr.mxu0 0.0
    %174 = vmatpush1.msra.mxu0 %v156
    %175 = vmatprep.subr.mxu0 0.0
    %176 = vmatpush1.msra.mxu0 %v155
    %177 = vmatprep.subr.mxu0 0.0
    %178 = vmatpush1.msra.mxu0 %v154
    %179 = vmatprep.subr.mxu0 0.0
    %180 = vmatpush1.msra.mxu0 %v153
    %181 = vmatprep.subr.mxu0 0.0
    %182 = vmatpush1.msra.mxu0 %v152
    %183 = vmatprep.subr.mxu0 0.0
    %184 = vmatpush1.msra.mxu0 %v151
    %185 = vmatprep.subr.mxu0 0.0
    %186 = vmatpush1.msra.mxu0 %v150
    %187 = vmatprep.subr.mxu0 0.0
    %188 = vmatpush1.msra.mxu0 %v149
    %189 = vmatprep.subr.mxu0 0.0
    %190 = vmatpush1.msra.mxu0 %v148
    %191 = vmatprep.subr.mxu0 0.0
    %192 = vmatpush1.msra.mxu0 %v147
    %193 = vmatprep.subr.mxu0 0.0
    %194 = vmatpush1.msra.mxu0 %v146
    %195 = vmatprep.subr.mxu0 0.0
    %196 = vmatpush1.msra.mxu0 %v145
    %197 = vmatprep.subr.mxu0 0.0
    %198 = vmatpush1.msra.mxu0 %v144
    %199 = vmatprep.subr.mxu0 0.0
    %200 = vmatpush2.msra.mxu0 0.0
    %201 = vmatprep.subr.mxu0 0.0
    %202 = vmatpush2.msra.mxu0 0.0
    %203 = vmatprep.subr.mxu0 0.0
    %204 = vmatpush2.msra.mxu0 0.0
    %205 = vmatprep.subr.mxu0 0.0
    %206 = vmatpush2.msra.mxu0 0.0
    %207 = vmatprep.subr.mxu0 0.0
    %208 = vmatpush2.msra.mxu0 0.0
    %209 = vmatprep.subr.mxu0 0.0
    %210 = vmatpush2.msra.mxu0 0.0
    %211 = vmatprep.subr.mxu0 0.0
    %212 = vmatpush2.msra.mxu0 0.0
    %213 = vmatprep.subr.mxu0 0.0
    %214 = vmatpush2.msra.mxu0 0.0
    %215 = vmatprep.subr.mxu0 0.0
    %216 = vmatpush2.msra.mxu0 0.0
    %217 = vmatprep.subr.mxu0 0.0
    %218 = vmatpush2.msra.mxu0 0.0
    %219 = vmatprep.subr.mxu0 0.0
    %220 = vmatpush2.msra.mxu0 0.0
    %221 = vmatprep.subr.mxu0 0.0
    %222 = vmatpush2.msra.mxu0 0.0
    %223 = vmatprep.subr.mxu0 0.0
    %224 = vmatpush2.msra.mxu0 0.0
    %225 = vmatprep.subr.mxu0 0.0
    %226 = vmatpush2.msra.mxu0 0.0
    %227 = vmatprep.subr.mxu0 0.0
    %228 = vmatpush2.msra.mxu0 0.0
    %229 = vmatprep.subr.mxu0 0.0
    %230 = vmatpush2.msra.mxu0 0.0
    %231 = vmatprep.mubr.f32.mxu0 0.0
    %232 = vmatmul.mubr.f32.gmra.mxu0 %v143
    %v233 = vpop.f32.mrf.mxu0
    %v234 = vadd.f32 %v165, %v233
    %v235 = vpop.f32.mrf.mxu0
    %236 = vdwg.mxu0
    %237 = vst [vmem:[#allocation7] sm:$0xff] %v234
    // Predicated region
    $region30: #{neural_net_forward.1} parent=1 // pred_check
      _
    $region31: #{neural_net_forward.1} parent=1 // pred_check_branch
      %239 = sbr.rel (0) target = $region33
    $region32: #{neural_net_forward.1} parent=1 // pred_region
      %s241 = ssub.s32 128, 128
      %242 = vsyncadd [#allocation4], %s241
      %s244 = sshll.u32 [#allocation7], 4
      %s245 = int_to_ptr.vmem [resolvable:$true] %s244
      %247 = dma.vmem_to_hbm [thread:$0]  %s245, 128, %s5, [#allocation4]
    $region33: #{neural_net_forward.1} parent=1 // pred_fallthru
      _
    // Predicated region
    $region34: #{neural_net_forward.1} parent=1 // pred_check
      _
    $region35: #{neural_net_forward.1} parent=1 // pred_check_branch
      %249 = sbr.rel (0) target = $region37
    $region36: #{neural_net_forward.1} parent=1 // pred_region
      %250 = dma.done [#allocation4], 128
    $region37: #{neural_net_forward.1} parent=1 // pred_fallthru
      _
    %251 = vsyncpa [#allocation3], 1
    %252 = vsyncpa [#allocation6], 1
    %253 = vsyncpa [#allocation4], 1

</llo_original>
